<compile_context>
chip_gen: v5e
topology: v5e:2x2
jax: 0.10.0
libtpu: 0.0.40
codegen_flags: <defaults>
</compile_context>

<pallas_src>
import jax
import jax.numpy as jnp
from jax.experimental import pallas as pl
from jax.experimental.pallas import tpu as pltpu

_LANE = 128
_SUBLANE = 8
_BLOCK_BYTES = 2 * 1024 * 1024   # per-array block; x + out, double-buffered ~ 8 MiB
_MAX_LANE_W = 2048


def _sech_kernel(params_ref, x_ref, o_ref):
    # params_ref (SMEM): [1 + a, 1 + b, 2 * c]  (pre-folded in the wrapper).
    A = params_ref[0]
    B = params_ref[1]
    C2 = params_ref[2]
    # Load at native width, upcast to f32 for the transcendentals, store back
    # in the original dtype (keeps HBM traffic at the input's byte width).
    x = x_ref[...].astype(jnp.float32)
    ex = jnp.exp(x)
    enx = jnp.exp(-x)          # kept as a true exp for numerical faithfulness
    denom = A * ex + B * enx
    o_ref[...] = (C2 * pl.reciprocal(denom, approx=False)).astype(o_ref.dtype)


def sech_mf(x, a=0.0, b=0.0, c=1.0):
    """Elementwise f(x) = 2c / ((1+a) e^x + (1+b) e^-x)  (sech for defaults)."""
    orig_shape = x.shape
    orig_dtype = x.dtype
    n = int(x.size)
    itemsize = jnp.dtype(orig_dtype).itemsize

    # --- choose a wide, lane-dense slab (rows, W): widest W needing no pad ---
    lane_w = None
    for cand in (2048, 1024, 512, 256, 128):
        if cand <= _MAX_LANE_W and n % (_SUBLANE * cand) == 0:
            lane_w = cand
            break

    flat = x.reshape(-1)
    padded_n = n
    if lane_w is None:
        # Ragged size: single pad up to the minimal (8,128) tile granule.
        lane_w = _LANE
        padded_n = pl.cdiv(n, _SUBLANE * lane_w) * (_SUBLANE * lane_w)
        flat = jnp.pad(flat, (0, padded_n - n))
    rows = padded_n // lane_w                     # multiple of 8 by construction

    # --- block rows: ~_BLOCK_BYTES per block, multiple of 8, divides rows ----
    block_rows = max(
        _SUBLANE,
        (_BLOCK_BYTES // (lane_w * itemsize)) // _SUBLANE * _SUBLANE,
    )
    block_rows = min(block_rows, rows)
    while rows % block_rows != 0:                 # rows % 8 == 0 -> terminates
        block_rows -= _SUBLANE

    x2 = flat.reshape(rows, lane_w)

    # Parameter arithmetic hoisted out of the kernel.
    params = jnp.asarray([1.0 + a, 1.0 + b, 2.0 * c], dtype=jnp.float32)

    grid = (rows // block_rows,)
    out2 = pl.pallas_call(
        _sech_kernel,
        out_shape=jax.ShapeDtypeStruct((rows, lane_w), orig_dtype),
        grid=grid,
        in_specs=[
            pl.BlockSpec(memory_space=pltpu.MemorySpace.SMEM),      # [1+a,1+b,2c]
            pl.BlockSpec((block_rows, lane_w), lambda i: (i, 0)),   # x tile
        ],
        out_specs=pl.BlockSpec((block_rows, lane_w), lambda i: (i, 0)),
        compiler_params=pltpu.CompilerParams(
            dimension_semantics=("parallel",),
        ),
    )(params, x2)

    out = out2.reshape(-1)
    if padded_n != n:
        out = out[:n]
    return out.reshape(orig_shape)


def _ref(x, a, b, c):
    xf = x.astype(jnp.float32)
    r = (2.0 * c) / ((1.0 + a) * jnp.exp(xf) + (1.0 + b) * jnp.exp(-xf))
    return r.astype(x.dtype)


if __name__ == "__main__":
    key = jax.random.PRNGKey(0)
    # Deterministic parameter init matching SechMF.__init__ defaults.
    a, b, c = 0.0, 0.0, 1.0

    # Main case: NCHW f32, batch=2, channels=4, spatial=16x16 (no-pad fast path).
    x = jax.random.normal(key, (2, 4, 16, 16), dtype=jnp.float32)
    y = jax.block_until_ready(sech_mf(x, a, b, c))
    assert y.shape == x.shape and y.dtype == x.dtype
    assert jnp.allclose(y, _ref(x, a, b, c), rtol=1e-6, atol=1e-6)

    # bf16 case: exercises in-kernel upcast/downcast path.
    xb = jax.random.normal(jax.random.PRNGKey(1), (2, 4, 16, 16), dtype=jnp.bfloat16)
    yb = jax.block_until_ready(sech_mf(xb, a, b, c))
    assert yb.dtype == xb.dtype
    assert jnp.allclose(yb.astype(jnp.float32), _ref(xb, a, b, c).astype(jnp.float32),
                        rtol=2e-2, atol=2e-2)

    # Ragged-size case: exercises the single-pad fallback path.
    xr = jax.random.normal(jax.random.PRNGKey(2), (3, 5, 7), dtype=jnp.float32)
    yr = jax.block_until_ready(sech_mf(xr, a, b, c))
    assert yr.shape == xr.shape
    assert jnp.allclose(yr, _ref(xr, a, b, c), rtol=1e-6, atol=1e-6)

    print("KERNEL_OK")
</pallas_src>

<mosaic_0001>
module attributes {stable_mosaic.version = 11 : i64} {
  func.func @_sech_kernel(%arg0: i32, %arg1: memref<3xf32, #tpu.memory_space<smem>>, %arg2: memref<8x256xf32, #tpu.memory_space<vmem>>, %arg3: memref<8x256xf32, #tpu.memory_space<vmem>>) attributes {dimension_semantics = [#tpu.dimension_semantics<parallel>], iteration_bounds = array<i64: 1>, scalar_prefetch = 0 : i64, scratch_operands = 0 : i64, tpu.core_type = #tpu.core_type<tc>, window_params = [{transform_indices = @transform_0, window_bounds = array<i64: 3>}, {transform_indices = @transform_1, window_bounds = array<i64: 8, 256>}, {transform_indices = @transform_2, window_bounds = array<i64: 8, 256>}]} {
    %c0 = arith.constant 0 : index
    %0 = memref.load %arg1[%c0] : memref<3xf32, #tpu.memory_space<smem>>
    %c1 = arith.constant 1 : index
    %1 = memref.load %arg1[%c1] : memref<3xf32, #tpu.memory_space<smem>>
    %c2 = arith.constant 2 : index
    %2 = memref.load %arg1[%c2] : memref<3xf32, #tpu.memory_space<smem>>
    %c0_0 = arith.constant 0 : index
    %c0_1 = arith.constant 0 : index
    %3 = vector.load %arg2[%c0_0, %c0_1] : memref<8x256xf32, #tpu.memory_space<vmem>>, vector<8x256xf32>
    %4 = math.exp %3 : vector<8x256xf32>
    %cst = arith.constant 0.000000e+00 : f32
    %5 = vector.broadcast %cst : f32 to vector<8x256xf32>
    %6 = arith.subf %5, %3 : vector<8x256xf32>
    %7 = math.exp %6 : vector<8x256xf32>
    %8 = vector.broadcast %0 : f32 to vector<8x256xf32>
    %9 = arith.mulf %8, %4 : vector<8x256xf32>
    %10 = vector.broadcast %1 : f32 to vector<8x256xf32>
    %11 = arith.mulf %10, %7 : vector<8x256xf32>
    %12 = arith.addf %9, %11 : vector<8x256xf32>
    %13 = tpu.reciprocal %12 : vector<8x256xf32> -> vector<8x256xf32>
    %14 = vector.broadcast %2 : f32 to vector<8x256xf32>
    %15 = arith.mulf %14, %13 : vector<8x256xf32>
    %c0_2 = arith.constant 0 : index
    %c0_3 = arith.constant 0 : index
    %16 = vector.load %arg3[%c0_2, %c0_3] : memref<8x256xf32, #tpu.memory_space<vmem>>, vector<8x256xf32>
    tpu.vector_store %arg3[%c0_2, %c0_3], %15 {strides = array<i32>} : memref<8x256xf32, #tpu.memory_space<vmem>>, vector<8x256xf32>,
    return
  }
  func.func @transform_0(%arg0: i32) -> i32 {
    %c0_i32 = arith.constant 0 : i32
    %c0_i32_0 = arith.constant 0 : i32
    return %c0_i32 : i32
  }
  func.func @transform_1(%arg0: i32) -> (i32, i32) {
    %c0_i32 = arith.constant 0 : i32
    %c0_i32_0 = arith.constant 0 : i32
    return %arg0, %c0_i32 : i32, i32
  }
  func.func @transform_2(%arg0: i32) -> (i32, i32) {
    %c0_i32 = arith.constant 0 : i32
    %c0_i32_0 = arith.constant 0 : i32
    return %arg0, %c0_i32 : i32, i32
  }
}

</mosaic_0001>

<llo_original>
// kernel: tpu_custom_call.1
$region0: #{tpu_custom_call.1}
  #allocation0 [shape = 'u32[]', space=smem, size = 0x4, offset = 0x4, fixed_abs, tag = 'smem constant byte address 0x4 - core index']
  #allocation1 [shape = 'u32[72,128]{1,0:T(1,128)}', space=vmem, size = 0x9000, scoped, tag = 'internal scratch']
  %s0 = inlined_call_operand.hbm [shape: f32[3], index: 0, kind: input, shape index: {}]
  %s1 = inlined_call_operand.hbm [shape: f32[8,256], index: 1, kind: input, shape index: {}]
  %s2 = inlined_call_operand.hbm [shape: f32[8,256], index: 2, kind: output, shape index: {}]
  %s3 = sld [smem:[#allocation0]]
  $region26: #{tpu_custom_call.1} parent=0
    _
  %s5 = ssub.s32 1, %s3
  %s6 = scalar_select 0, %s5, %s3
  $region1: #{tpu_custom_call.1} parent=0
    #allocation2 [shape = 'u8[512]{0}', space=smem, size = 0x200, scoped, tag = 'input window, operand 0, single buffered']
    #allocation3 [shape = 's32[1]{0}', space=sflag, size = 0x4, scoped, tag = 'scoped memory for tpu_custom_call.1']
    #allocation4 [shape = 's32[1]{0}', space=sflag, size = 0x4, scoped, tag = 'scoped memory for tpu_custom_call.1']
    #allocation5 [shape = 's32[1]{0}', space=sflag, size = 0x4, scoped, tag = 'scoped memory for tpu_custom_call.1']
    #allocation6 [shape = 'u8[8192]{0}', space=vmem, size = 0x2000, scoped, tag = 'input window, operand 1, single buffered']
    #allocation7 [shape = 'u8[8192]{0}', space=vmem, size = 0x2000, scoped, tag = 'output window, operand 0, single buffered']
    %7 = vsyncpa [#allocation5], 0
    %8 = vsyncpa [#allocation3], 0
    %9 = vsyncpa [#allocation4], 0
    // Predicated region
    $region2: #{tpu_custom_call.1} parent=1 // pred_check
      _
    $region3: #{tpu_custom_call.1} parent=1 // pred_check_branch
      %11 = sbr.rel (0) target = $region5
    $region4: #{tpu_custom_call.1} parent=1 // pred_region
      %13 = vsyncadd [#allocation5], 0
      %s15 = sshll.u32 %s0, 4
      %s16 = int_to_ptr.hbm [resolvable:$true] %s15
      %18 = dma.hbm_to_smem %s16, 16, [#allocation2], [#allocation5]
    $region5: #{tpu_custom_call.1} parent=1 // pred_fallthru
      _
    // Predicated region
    $region6: #{tpu_custom_call.1} parent=1 // pred_check
      _
    $region7: #{tpu_custom_call.1} parent=1 // pred_check_branch
      %20 = sbr.rel (0) target = $region9
    $region8: #{tpu_custom_call.1} parent=1 // pred_region
      %22 = vsyncadd [#allocation3], 0
      %s24 = sshll.u32 %s1, 4
      %s25 = int_to_ptr.hbm [resolvable:$true] %s24
      %s26 = sshll.u32 [#allocation6], 4
      %s27 = int_to_ptr.vmem [resolvable:$true] %s26
      %29 = dma.hbm_to_vmem [thread:$0]  %s25, 256, %s27, [#allocation3]
    $region9: #{tpu_custom_call.1} parent=1 // pred_fallthru
      _
    // Predicated region
    $region10: #{tpu_custom_call.1} parent=1 // pred_check
      _
    $region11: #{tpu_custom_call.1} parent=1 // pred_check_branch
      %31 = sbr.rel (0) target = $region13
    $region12: #{tpu_custom_call.1} parent=1 // pred_region
      %33 = dma.done [#allocation5], 16
    $region13: #{tpu_custom_call.1} parent=1 // pred_fallthru
      _
    // Predicated region
    $region14: #{tpu_custom_call.1} parent=1 // pred_check
      _
    $region15: #{tpu_custom_call.1} parent=1 // pred_check_branch
      %35 = sbr.rel (0) target = $region17
    $region16: #{tpu_custom_call.1} parent=1 // pred_region
      %37 = dma.done [#allocation3], 256
    $region17: #{tpu_custom_call.1} parent=1 // pred_fallthru
      _
    %38 = sfence
    %s39 = sld [smem:[#allocation2]]
    %s40 = sld [smem:[#allocation2 + $0x1]]
    %s41 = sld [smem:[#allocation2 + $0x2]]
    %v42 = vld [vmem:[#allocation6] sm:$0xff]
    %v43 = vld [vmem:[#allocation6 + $0x8] sm:$0xff]
    %v44 = vmul.f32 %v42, 1.442695
    %v45 = vpow.pop %v44
    %v46 = vmul.f32 %v43, 1.442695
    %v47 = vpow.pop %v46
    %v48 = vsub.f32 0.0, %v42
    %v49 = vsub.f32 0.0, %v43
    %v50 = vmul.f32 %v48, 1.442695
    %v51 = vpow.pop %v50
    %v52 = vmul.f32 %v49, 1.442695
    %v53 = vpow.pop %v52
    %v54 = vstv %s39
    %v55 = vmul.f32 %v54, %v45
    %v56 = vmul.f32 %v54, %v47
    %v57 = vstv %s40
    %v58 = vmul.f32 %v57, %v51
    %v59 = vmul.f32 %v57, %v53
    %v60 = vadd.f32 %v55, %v58
    %v61 = vadd.f32 %v56, %v59
    %v62 = vrcp.pop %v60
    %v63 = vmul.f32 %v60, %v62
    %v64 = vsub.f32 1.0, %v63
    %v65 = vmul.f32 %v62, %v64
    %v66 = vadd.f32 %v62, %v65
    %vm67 = vweird.f32 %v60
    %vm68 = vweird.f32 %v62
    %vm69 = vmor %vm67, %vm68
    %v70 = vsel %vm69, %v62, %v66
    %v71 = vand.u32 2147483647, %v60
    %vm72 = vcmp.eq.f32.partialorder %v71, 8.507059e+37
    %v73 = vand.u32 %v60, 2147483648
    %v74 = vor.u32 1.1754944e-38, %v73
    %v75 = vsel %vm72, %v74, %v70
    %v76 = vrcp.pop %v61
    %v77 = vmul.f32 %v61, %v76
    %v78 = vsub.f32 1.0, %v77
    %v79 = vmul.f32 %v76, %v78
    %v80 = vadd.f32 %v76, %v79
    %vm81 = vweird.f32 %v61
    %vm82 = vweird.f32 %v76
    %vm83 = vmor %vm81, %vm82
    %v84 = vsel %vm83, %v76, %v80
    %v85 = vand.u32 2147483647, %v61
    %vm86 = vcmp.eq.f32.partialorder %v85, 8.507059e+37
    %v87 = vand.u32 %v61, 2147483648
    %v88 = vor.u32 1.1754944e-38, %v87
    %v89 = vsel %vm86, %v88, %v84
    %v90 = vstv %s41
    %v91 = vmul.f32 %v90, %v75
    %v92 = vmul.f32 %v90, %v89
    %93 = vst [vmem:[#allocation7] sm:$0xff] %v91
    %94 = vst [vmem:[#allocation7 + $0x8] sm:$0xff] %v92
    // Predicated region
    $region18: #{tpu_custom_call.1} parent=1 // pred_check
      _
    $region19: #{tpu_custom_call.1} parent=1 // pred_check_branch
      %96 = sbr.rel (0) target = $region21
    $region20: #{tpu_custom_call.1} parent=1 // pred_region
      %98 = vsyncadd [#allocation4], 0
      %s100 = sshll.u32 [#allocation7], 4
      %s101 = int_to_ptr.vmem [resolvable:$true] %s100
      %s102 = sshll.u32 %s2, 4
      %s103 = int_to_ptr.hbm [resolvable:$true] %s102
      %105 = dma.vmem_to_hbm [thread:$0]  %s101, 256, %s103, [#allocation4]
    $region21: #{tpu_custom_call.1} parent=1 // pred_fallthru
      _
    // Predicated region
    $region22: #{tpu_custom_call.1} parent=1 // pred_check
      _
    $region23: #{tpu_custom_call.1} parent=1 // pred_check_branch
      %107 = sbr.rel (0) target = $region25
    $region24: #{tpu_custom_call.1} parent=1 // pred_region
      %109 = dma.done [#allocation4], 256
    $region25: #{tpu_custom_call.1} parent=1 // pred_fallthru
      _
    %110 = vsyncpa [#allocation3], 1
    %111 = vsyncpa [#allocation4], 1
    %112 = vsyncpa [#allocation5], 1

</llo_original>
